<compile_context>
chip_gen: v7x
topology: tpu7x:2x2x1
jax: 0.10.0
libtpu: 0.0.40
codegen_flags: <defaults>
</compile_context>

<pallas_src>
import math

import jax
import jax.numpy as jnp
from jax.experimental import pallas as pl
from jax.experimental.pallas import tpu as pltpu


def _pe_kernel(interval_ref, div_ref, w_ref, phase_ref, out_ref):
    # out_ref: [TB, TS, d_model]; interval_ref: [TB, TS, 1];
    # div_ref / w_ref / phase_ref: [1, d_model] resident constants.
    ts = out_ref.shape[1]
    s0 = pl.program_id(1) * ts
    # position rows for this seq tile (== arange slice of the PyTorch buffer).
    pos = (jax.lax.broadcasted_iota(jnp.int32, (ts, 1), 0) + s0).astype(jnp.float32)

    # Per-tile base angle (identical across the batch block): pos*div + phase.
    base = pos * div_ref[...] + phase_ref[...]                 # [TS, d_model]
    # phi = Linear(1, d_model//2, bias=False)(interval), duplicated to d_model
    # via w_full so a single lane-dense sin covers both sin and cos halves.
    phi = interval_ref[...] * w_ref[...][None, :, :]           # [TB, TS, d_model]
    out_ref[...] = jnp.sin(base[None, :, :] + phi)             # one lane-dense store


def _choose_tiles(B, S, d_model, target_bytes=2 * 1024 * 1024):
    """Pick (TB, TS) so the f32 output block is ~target_bytes, sublane-aligned."""
    bytes_per_row = d_model * 4
    max_rows = max(8, target_bytes // bytes_per_row)
    if S <= max_rows:
        ts = S                                   # full seq dim (always legal)
    else:
        ts = max(8, (max_rows // 8) * 8)         # multiple of 8 (sublane-aligned)
    tb = max(1, target_bytes // (ts * bytes_per_row))
    tb = min(tb, B)
    # Keep >= 2 grid steps when possible so megacore (v7x) can split the work.
    if B > 1 and tb == B and pl.cdiv(S, ts) == 1:
        tb = max(1, B // 2)
    return tb, ts


def time_shifted_positional_encoding(interval, div_term, weight, d_model, max_len=5000):
    """interval: [B, S] float; div_term: [H]; weight: [H] (Linear(1, H, bias=False))."""
    B, S = interval.shape
    H = d_model // 2
    assert S <= max_len, "seq_len exceeds positional-encoding max_len"

    interval3d = interval.astype(jnp.float32)[..., None]            # [B, S, 1]

    # Host-side pre-concatenated constants for the single-sin formulation.
    div = div_term.astype(jnp.float32).reshape(H)
    w = weight.astype(jnp.float32).reshape(H)
    div_full = jnp.concatenate([div, div]).reshape(1, d_model)       # [1, d_model]
    w_full = jnp.concatenate([w, w]).reshape(1, d_model)             # [1, d_model]
    phase = jnp.concatenate(
        [jnp.zeros((H,), jnp.float32),
         jnp.full((H,), 0.5 * math.pi, jnp.float32)]
    ).reshape(1, d_model)                                            # sin | cos(=sin+pi/2)

    TB, TS = _choose_tiles(B, S, d_model)
    grid = (pl.cdiv(B, TB), pl.cdiv(S, TS))

    out = pl.pallas_call(
        _pe_kernel,
        out_shape=jax.ShapeDtypeStruct((B, S, d_model), jnp.float32),
        grid=grid,
        in_specs=[
            pl.BlockSpec((TB, TS, 1), lambda b, s: (b, s, 0)),       # interval
            pl.BlockSpec((1, d_model), lambda b, s: (0, 0)),         # div_full (resident)
            pl.BlockSpec((1, d_model), lambda b, s: (0, 0)),         # w_full (resident)
            pl.BlockSpec((1, d_model), lambda b, s: (0, 0)),         # phase (resident)
        ],
        out_specs=pl.BlockSpec((TB, TS, d_model), lambda b, s: (b, s, 0)),
        compiler_params=pltpu.CompilerParams(
            dimension_semantics=("parallel", "parallel"),
            vmem_limit_bytes=32 * 1024 * 1024,
        ),
    )(interval3d, div_full, w_full, phase)
    return out


def reference(interval, position, div_term, weight, d_model):
    # Pure-JAX reference mirroring the PyTorch forward (sin/cos + concat).
    S = interval.shape[1]
    H = d_model // 2
    phi = interval[..., None] * weight.reshape(1, 1, H)              # Linear(1, H, bias=False)
    arc = (position[:S, :] * div_term.reshape(1, H))[None, :, :]     # [1, S, H]
    return jnp.concatenate([jnp.sin(arc + phi), jnp.cos(arc + phi)], axis=-1)


if __name__ == "__main__":
    batch, seq_len, d_model, max_len = 2, 8, 32, 64
    H = d_model // 2

    key = jax.random.PRNGKey(0)
    k_int, k_w = jax.random.split(key)

    # Buffers from __init__ (deterministic, matching PyTorch construction).
    position = jnp.arange(0, max_len, dtype=jnp.float32)[:, None]                 # [max_len, 1]
    div_term = jnp.exp(
        jnp.arange(0, d_model, 2, dtype=jnp.float32) * (-(math.log(10000.0) / d_model))
    )                                                                             # [H]
    # nn.Linear(1, H, bias=False) weight; synthetic deterministic init.
    weight = jax.random.uniform(k_w, (H,), minval=-1.0, maxval=1.0, dtype=jnp.float32)

    # Forward inputs: time_seq x and time_delta_seq interval, both [B, S]
    # (x only determines seq_len in the PyTorch forward).
    x = jnp.cumsum(jax.random.uniform(k_int, (batch, seq_len), dtype=jnp.float32), axis=1)
    interval = jax.random.uniform(k_int, (batch, seq_len), dtype=jnp.float32)

    pe = time_shifted_positional_encoding(interval, div_term, weight, d_model, max_len=max_len)
    pe = jax.block_until_ready(pe)

    ref = reference(interval, position, div_term, weight, d_model)
    assert pe.shape == (batch, seq_len, d_model)
    assert pe.dtype == jnp.float32
    assert jnp.allclose(pe, ref, atol=1e-5, rtol=1e-5), "mismatch vs reference"

    print("KERNEL_OK")
</pallas_src>

<mosaic_0001>
module attributes {stable_mosaic.version = 11 : i64} {
  func.func @_pe_kernel(%arg0: i32, %arg1: i32, %arg2: memref<1x8x1xf32, #tpu.memory_space<vmem>>, %arg3: memref<1x32xf32, #tpu.memory_space<vmem>>, %arg4: memref<1x32xf32, #tpu.memory_space<vmem>>, %arg5: memref<1x32xf32, #tpu.memory_space<vmem>>, %arg6: memref<1x8x32xf32, #tpu.memory_space<vmem>>) attributes {dimension_semantics = [#tpu.dimension_semantics<parallel>, #tpu.dimension_semantics<parallel>], iteration_bounds = array<i64: 2, 1>, scalar_prefetch = 0 : i64, scratch_operands = 0 : i64, tpu.core_type = #tpu.core_type<tc>, window_params = [{transform_indices = @transform_0, window_bounds = array<i64: 1, 8, 1>}, {pipeline_mode = #tpu.pipeline_mode<synchronous>, transform_indices = @transform_1, window_bounds = array<i64: 1, 32>}, {pipeline_mode = #tpu.pipeline_mode<synchronous>, transform_indices = @transform_2, window_bounds = array<i64: 1, 32>}, {pipeline_mode = #tpu.pipeline_mode<synchronous>, transform_indices = @transform_3, window_bounds = array<i64: 1, 32>}, {transform_indices = @transform_4, window_bounds = array<i64: 1, 8, 32>}]} {
    %c8_i32 = arith.constant 8 : i32
    %0 = arith.muli %arg1, %c8_i32 : i32
    %1 = tpu.iota {dimensions = array<i32: 0>} : vector<8x1xi32>
    %2 = vector.broadcast %0 : i32 to vector<8x1xi32>
    %3 = arith.addi %1, %2 : vector<8x1xi32>
    %4 = arith.sitofp %3 : vector<8x1xi32> to vector<8x1xf32>
    %c0 = arith.constant 0 : index
    %c0_0 = arith.constant 0 : index
    %5 = vector.load %arg3[%c0, %c0_0] : memref<1x32xf32, #tpu.memory_space<vmem>>, vector<1x32xf32>
    %6 = vector.broadcast %4 : vector<8x1xf32> to vector<8x32xf32>
    %7 = vector.broadcast %5 : vector<1x32xf32> to vector<8x32xf32>
    %8 = arith.mulf %6, %7 : vector<8x32xf32>
    %c0_1 = arith.constant 0 : index
    %c0_2 = arith.constant 0 : index
    %9 = vector.load %arg5[%c0_1, %c0_2] : memref<1x32xf32, #tpu.memory_space<vmem>>, vector<1x32xf32>
    %10 = vector.broadcast %9 : vector<1x32xf32> to vector<8x32xf32>
    %11 = arith.addf %8, %10 : vector<8x32xf32>
    %c0_3 = arith.constant 0 : index
    %c0_4 = arith.constant 0 : index
    %c0_5 = arith.constant 0 : index
    %12 = vector.load %arg2[%c0_3, %c0_4, %c0_5] : memref<1x8x1xf32, #tpu.memory_space<vmem>>, vector<1x8x1xf32>
    %c0_6 = arith.constant 0 : index
    %c0_7 = arith.constant 0 : index
    %13 = vector.load %arg4[%c0_6, %c0_7] : memref<1x32xf32, #tpu.memory_space<vmem>>, vector<1x32xf32>
    %14 = vector.shape_cast %13 : vector<1x32xf32> to vector<1x1x32xf32>
    %15 = vector.broadcast %12 : vector<1x8x1xf32> to vector<1x8x32xf32>
    %16 = vector.broadcast %14 : vector<1x1x32xf32> to vector<1x8x32xf32>
    %17 = arith.mulf %15, %16 : vector<1x8x32xf32>
    %18 = vector.shape_cast %11 : vector<8x32xf32> to vector<1x8x32xf32>
    %19 = arith.addf %18, %17 : vector<1x8x32xf32>
    %20 = math.sin %19 : vector<1x8x32xf32>
    %c0_8 = arith.constant 0 : index
    %c0_9 = arith.constant 0 : index
    %c0_10 = arith.constant 0 : index
    %21 = vector.load %arg6[%c0_8, %c0_9, %c0_10] : memref<1x8x32xf32, #tpu.memory_space<vmem>>, vector<1x8x32xf32>
    tpu.vector_store %arg6[%c0_8, %c0_9, %c0_10], %20 {strides = array<i32>} : memref<1x8x32xf32, #tpu.memory_space<vmem>>, vector<1x8x32xf32>,
    return
  }
  func.func @transform_0(%arg0: i32, %arg1: i32) -> (i32, i32, i32) {
    %c0_i32 = arith.constant 0 : i32
    %c0_i32_0 = arith.constant 0 : i32
    return %arg0, %arg1, %c0_i32 : i32, i32, i32
  }
  func.func @transform_1(%arg0: i32, %arg1: i32) -> (i32, i32) {
    %c0_i32 = arith.constant 0 : i32
    %c0_i32_0 = arith.constant 0 : i32
    %c0_i32_1 = arith.constant 0 : i32
    return %c0_i32, %c0_i32_0 : i32, i32
  }
  func.func @transform_2(%arg0: i32, %arg1: i32) -> (i32, i32) {
    %c0_i32 = arith.constant 0 : i32
    %c0_i32_0 = arith.constant 0 : i32
    %c0_i32_1 = arith.constant 0 : i32
    return %c0_i32, %c0_i32_0 : i32, i32
  }
  func.func @transform_3(%arg0: i32, %arg1: i32) -> (i32, i32) {
    %c0_i32 = arith.constant 0 : i32
    %c0_i32_0 = arith.constant 0 : i32
    %c0_i32_1 = arith.constant 0 : i32
    return %c0_i32, %c0_i32_0 : i32, i32
  }
  func.func @transform_4(%arg0: i32, %arg1: i32) -> (i32, i32, i32) {
    %c0_i32 = arith.constant 0 : i32
    %c0_i32_0 = arith.constant 0 : i32
    return %arg0, %arg1, %c0_i32 : i32, i32, i32
  }
}

</mosaic_0001>

<llo_original>
// kernel: tpu_custom_call.1
$region0: #{tpu_custom_call.1}
  #allocation0 [shape = 'u32[]', space=smem, size = 0x4, offset = 0x4, fixed_abs, tag = 'smem constant byte address 0x4 - core index']
  #allocation1 [shape = 'u32[144,128]{1,0:T(1,128)}', space=vmem, size = 0x12000, scoped, tag = 'internal scratch']
  %s0 = inlined_call_operand.vmem [shape: f32[2,8,1], index: 0, kind: input, shape index: {}]
  %s1 = inlined_call_operand.vmem [shape: f32[1,32], index: 1, kind: input, shape index: {}]
  %s2 = inlined_call_operand.vmem [shape: f32[1,32], index: 2, kind: input, shape index: {}]
  %s3 = inlined_call_operand.vmem [shape: f32[1,32], index: 3, kind: input, shape index: {}]
  %s4 = inlined_call_operand.hbm [shape: f32[2,8,32], index: 4, kind: output, shape index: {}]
  %s5 = sld [smem:[#allocation0]]
  $region49: #{tpu_custom_call.1} parent=0
    _
  %s7 = ssub.s32 1, %s5
  %s8 = scalar_select 0, %s7, %s5
  $region1: #{tpu_custom_call.1} parent=0
    #allocation2 [shape = 'u8[8192]{0}', space=vmem, size = 0x2000, scoped, tag = 'output window, operand 0']
    #allocation3 [shape = 's32[2]{0}', space=sflag, size = 0x8, scoped, tag = 'scoped memory for tpu_custom_call.1']
    %9 = vsyncpa [#allocation3], 0
    %s10 = scalar_lea.sflag [#allocation3], 1
    %11 = vsyncpa %s10, 0
    loop: start=0, step=1, limit=4
    $region2: #{tpu_custom_call.1} parent=1 // loop_pre_header
      _
    $region3: #{tpu_custom_call.1} parent=1 // loop_header
      %s13 = sphi 0, %s17
      %p14 = scmp.ge.s32.totalorder %s13, 4
      %s20 = sphi 0, %s32
      %s21 = sphi 0, %s28
      %s22 = sphi 0, %s20
      %s23 = sphi 0, %s21
      %s24 = sphi 0, %s22
      %s25 = sphi 0, %s23
      %s37 = sphi 0, %s39
      %s40 = sphi 0, %s37
      %s41 = sphi 0, %s40
      %s57 = sphi 0, %s41
      %s61 = sphi 0, %s61
      %s63 = sphi 0, %s61
      %s64 = sphi 0, %s63
      %s78 = sphi 0, %s64
      %s82 = sphi 0, %s82
      %s84 = sphi 0, %s82
      %s85 = sphi 0, %s84
      %s99 = sphi 0, %s85
      %s103 = sphi 0, %s103
      %s105 = sphi 0, %s103
      %s106 = sphi 0, %s105
      %s120 = sphi 0, %s106
      %s128 = sphi 0, %s130
      %s131 = sphi 0, %s128
      %s132 = sphi 0, %s131
      %s148 = sphi 0, %s132
    $region4: #{tpu_custom_call.1} parent=1 // loop_header_branch
      %16 = sbr.rel (%p14) target = $region8
    $region5: #{tpu_custom_call.1} parent=1 // loop_body
      %s18 = ssub.s32 %s13, 1
      %s19 = ssub.s32 %s13, 2
      %s26 = sadd.s32 1, %s21
      %p27 = scmp.ge.s32.totalorder %s26, 1
      %s28 = scalar_select %p27, 0, %s26
      %s29 = sadd.s32 1, %s20
      %s30 = scalar_select %p27, %s29, %s20
      %p31 = scmp.ge.s32.totalorder %s30, 2
      %s32 = scalar_select %p31, 0, %s30
      %s33 = ssub.s32 %s20, %s32
      %s34 = ssub.s32 %s21, %s28
      %s35 = sor.u32 %s33, %s34
      %p36 = scmp.eq.s32.totalorder %s35, 0
      %s38 = sadd.s32 %s37, 1
      %s39 = scalar_select %p36, %s37, %s38
      %p42 = pneg %p36
      %p43 = scmp.eq.s32.totalorder %s13, 1
      %p44 = por %p42, %p43
      %p45 = scmp.ne.s32.totalorder %s37, %s40
      %p46 = scmp.eq.s32.totalorder %s13, 0
      %p47 = por %p45, %p46
      %p48 = scmp.ne.s32.totalorder %s37, %s40
      %p49 = scmp.eq.s32.totalorder %s18, 1
      %p50 = por %p48, %p49
      %p51 = scmp.ne.s32.totalorder %s40, %s41
      %p52 = scmp.eq.s32.totalorder %s18, 0
      %p53 = por %p51, %p52
      %p54 = scmp.ne.s32.totalorder %s40, %s41
      %p55 = scmp.eq.s32.totalorder %s19, 1
      %p56 = por %p54, %p55
      %p58 = scmp.ne.s32.totalorder %s41, %s57
      %p59 = scmp.eq.s32.totalorder %s19, 0
      %p60 = por %p58, %p59
      %s62 = sadd.s32 %s61, 1
      %p65 = scmp.eq.s32.totalorder %s13, 1
      %p66 = scmp.ne.s32.totalorder %s61, %s63
      %p67 = scmp.eq.s32.totalorder %s13, 0
      %p68 = por %p66, %p67
      %p69 = scmp.ne.s32.totalorder %s61, %s63
      %p70 = scmp.eq.s32.totalorder %s18, 1
      %p71 = por %p69, %p70
      %p72 = scmp.ne.s32.totalorder %s63, %s64
      %p73 = scmp.eq.s32.totalorder %s18, 0
      %p74 = por %p72, %p73
      %p75 = scmp.ne.s32.totalorder %s63, %s64
      %p76 = scmp.eq.s32.totalorder %s19, 1
      %p77 = por %p75, %p76
      %p79 = scmp.ne.s32.totalorder %s64, %s78
      %p80 = scmp.eq.s32.totalorder %s19, 0
      %p81 = por %p79, %p80
      %s83 = sadd.s32 %s82, 1
      %p86 = scmp.eq.s32.totalorder %s13, 1
      %p87 = scmp.ne.s32.totalorder %s82, %s84
      %p88 = scmp.eq.s32.totalorder %s13, 0
      %p89 = por %p87, %p88
      %p90 = scmp.ne.s32.totalorder %s82, %s84
      %p91 = scmp.eq.s32.totalorder %s18, 1
      %p92 = por %p90, %p91
      %p93 = scmp.ne.s32.totalorder %s84, %s85
      %p94 = scmp.eq.s32.totalorder %s18, 0
      %p95 = por %p93, %p94
      %p96 = scmp.ne.s32.totalorder %s84, %s85
      %p97 = scmp.eq.s32.totalorder %s19, 1
      %p98 = por %p96, %p97
      %p100 = scmp.ne.s32.totalorder %s85, %s99
      %p101 = scmp.eq.s32.totalorder %s19, 0
      %p102 = por %p100, %p101
      %s104 = sadd.s32 %s103, 1
      %p107 = scmp.eq.s32.totalorder %s13, 1
      %p108 = scmp.ne.s32.totalorder %s103, %s105
      %p109 = scmp.eq.s32.totalorder %s13, 0
      %p110 = por %p108, %p109
      %p111 = scmp.ne.s32.totalorder %s103, %s105
      %p112 = scmp.eq.s32.totalorder %s18, 1
      %p113 = por %p111, %p112
      %p114 = scmp.ne.s32.totalorder %s105, %s106
      %p115 = scmp.eq.s32.totalorder %s18, 0
      %p116 = por %p114, %p115
      %p117 = scmp.ne.s32.totalorder %s105, %s106
      %p118 = scmp.eq.s32.totalorder %s19, 1
      %p119 = por %p117, %p118
      %p121 = scmp.ne.s32.totalorder %s106, %s120
      %p122 = scmp.eq.s32.totalorder %s19, 0
      %p123 = por %p121, %p122
      %s124 = ssub.s32 %s20, %s32
      %s125 = ssub.s32 %s21, %s28
      %s126 = sor.u32 %s124, %s125
      %p127 = scmp.eq.s32.totalorder %s126, 0
      %s129 = sadd.s32 %s128, 1
      %s130 = scalar_select %p127, %s128, %s129
      %p133 = pneg %p127
      %p134 = scmp.eq.s32.totalorder %s13, 1
      %p135 = por %p133, %p134
      %p136 = scmp.ne.s32.totalorder %s128, %s131
      %p137 = scmp.eq.s32.totalorder %s13, 0
      %p138 = por %p136, %p137
      %p139 = scmp.ne.s32.totalorder %s128, %s131
      %p140 = scmp.eq.s32.totalorder %s18, 1
      %p141 = por %p139, %p140
      %p142 = scmp.ne.s32.totalorder %s131, %s132
      %p143 = scmp.eq.s32.totalorder %s18, 0
      %p144 = por %p142, %p143
      %p145 = scmp.ne.s32.totalorder %s131, %s132
      %p146 = scmp.eq.s32.totalorder %s19, 1
      %p147 = por %p145, %p146
      %p149 = scmp.ne.s32.totalorder %s132, %s148
      %p150 = scmp.eq.s32.totalorder %s19, 0
      %p151 = por %p149, %p150
      %p152 = scmp.le.s32.totalorder 1, %s13
      %p153 = scmp.lt.s32.totalorder %s13, 3
      %p154 = pnand %p152, %p153
      %p155 = pneg %p154
      // Predicated region
      $region9: #{tpu_custom_call.1} parent=5 // pred_check
        _
      $region10: #{tpu_custom_call.1} parent=5 // pred_check_branch
        %157 = sbr.rel (%p154) target = $region12
      $region11: #{tpu_custom_call.1} parent=5 // pred_region
        %s158 = ssub.s32 %s13, 1
        // Predicated region
        $region13: #{tpu_custom_call.1} parent=11 // pred_check
          %p159 = pneg %p74
        $region14: #{tpu_custom_call.1} parent=11 // pred_check_branch
          %161 = sbr.rel (%p159) target = $region16
        $region15: #{tpu_custom_call.1} parent=11 // pred_region
          _
        $region16: #{tpu_custom_call.1} parent=11 // pred_fallthru
          _
        // Predicated region
        $region17: #{tpu_custom_call.1} parent=11 // pred_check
          %p162 = pneg %p95
        $region18: #{tpu_custom_call.1} parent=11 // pred_check_branch
          %164 = sbr.rel (%p162) target = $region20
        $region19: #{tpu_custom_call.1} parent=11 // pred_region
          _
        $region20: #{tpu_custom_call.1} parent=11 // pred_fallthru
          _
        // Predicated region
        $region21: #{tpu_custom_call.1} parent=11 // pred_check
          %p165 = pneg %p116
        $region22: #{tpu_custom_call.1} parent=11 // pred_check_branch
          %167 = sbr.rel (%p165) target = $region24
        $region23: #{tpu_custom_call.1} parent=11 // pred_region
          _
        $region24: #{tpu_custom_call.1} parent=11 // pred_fallthru
          _
      $region12: #{tpu_custom_call.1} parent=5 // pred_fallthru
        _
      %p168 = scmp.lt.s32.totalorder %s13, 2
      // Predicated region
      $region25: #{tpu_custom_call.1} parent=5 // pred_check
        %p169 = pneg %p168
      $region26: #{tpu_custom_call.1} parent=5 // pred_check_branch
        %171 = sbr.rel (%p169) target = $region28
      $region27: #{tpu_custom_call.1} parent=5 // pred_region
        // Predicated region
        $region29: #{tpu_custom_call.1} parent=27 // pred_check
          %p172 = pneg %p47
        $region30: #{tpu_custom_call.1} parent=27 // pred_check_branch
          %174 = sbr.rel (%p172) target = $region32
        $region31: #{tpu_custom_call.1} parent=27 // pred_region
          %p175 = scmp.lt.s32.totalorder %s20, 1
          %s176 = scalar_select %p175, %s20, 1
          %p177 = scmp.lt.s32.totalorder %s21, 0
          %s178 = scalar_select %p177, %s21, 0
          %s179 = sadd.s32 %s178, %s176
          %s180 = smul.addr %s179, 8
          %s181 = scalar_lea.vmem %s0, %s180
        $region32: #{tpu_custom_call.1} parent=27 // pred_fallthru
          _
      $region28: #{tpu_custom_call.1} parent=5 // pred_fallthru
        _
      %p182 = scmp.le.s32.totalorder 1, %s13
      %p183 = scmp.lt.s32.totalorder %s13, 3
      %p184 = pnand %p182, %p183
      %p185 = pneg %p184
      // Predicated region
      $region33: #{tpu_custom_call.1} parent=5 // pred_check
        _
      $region34: #{tpu_custom_call.1} parent=5 // pred_check_branch
        %187 = sbr.rel (%p184) target = $region36
      $region35: #{tpu_custom_call.1} parent=5 // pred_region
        %s188 = ssub.s32 %s13, 1
        %p189 = scmp.lt.s32.totalorder %s22, 1
        %s190 = scalar_select %p189, %s22, 1
        %p191 = scmp.lt.s32.totalorder %s23, 0
        %s192 = scalar_select %p191, %s23, 0
        %s193 = sadd.s32 %s192, %s190
        %s194 = smul.addr %s193, 8
        %s195 = scalar_lea.vmem %s0, %s194
        %p196 = pneg %p53
        %p197 = pneg %p50
        %p198 = pneg %p74
        %p199 = pneg %p71
        %p200 = pneg %p95
        %p201 = pneg %p92
        %p202 = pneg %p116
        %p203 = pneg %p113
        %p204 = pneg %p144
        %p205 = pneg %p141
        %s206 = sand.u32 %s131, 1
        %s207 = scalar_lea.sflag [#allocation3], %s206
        %s208 = sand.u32 %s131, 1
        %s209 = smul.addr %s208, 8
        %s210 = scalar_lea.vmem [#allocation2], %s209
        %p211 = scmp.lt.s32.totalorder %s22, 1
        %s212 = scalar_select %p211, %s22, 1
        %p213 = scmp.lt.s32.totalorder %s23, 0
        %s214 = scalar_select %p213, %s23, 0
        %s215 = sadd.s32 %s214, %s212
        %s216 = smul.addr %s215, 8
        %s217 = scalar_lea.vmem %s0, %s216
        %s218 = smul.u32 %s23, 8
        %v219 = vlaneseq
        %v220 = vshrl.u32 %v219, 7
        %v221 = vstv %s218
        %v222 = vadd.s32 %v220, %v221
        %v223 = vcvt.s32.f32 %v222
        %v224 = vld [vmem:[%s1] sm:$0x1]
        %v226 = vlaneseq
        %v227 = vshrl.u32 %v226, 7
        %v228 = vsub.s32 0, %v227
        %v229 = vrot.slane %v224, %v228
        %v231 = vmul.f32 %v223, %v229
        %v232 = vld [vmem:[%s3] sm:$0x1]
        %v234 = vlaneseq
        %v235 = vshrl.u32 %v234, 7
        %v236 = vsub.s32 0, %v235
        %v237 = vrot.slane %v232, %v236
        %v239 = vadd.f32 %v231, %v237
        %v240 = vld [vmem:[%s217] sm:$0xff]
        %v241 = vld [vmem:[%s2] sm:$0x1]
        %243 = vset.pattern.permute.xlu0 0
        %244 = vperm.xlu0 %243, %v240
        %v245 = vpop.permute.xlu0 %244
        %v248 = vlaneseq
        %v249 = vshrl.u32 %v248, 7
        %v250 = vsub.s32 0, %v249
        %v251 = vrot.slane %v241, %v250
        %v253 = vmul.f32 %v245, %v251
        %v254 = vadd.f32 %v239, %v253
        %v255 = vand.u32 2147483647, %v254
        %vm256 = vcmp.le.f32.partialorder %v255, 0.7853982
        %vm257 = vcmp.lt.s32.totalorder %v254, 0
        %v258 = vand.u32 %v254, 2139095040
        %v259 = vshrl.u32 %v258, 23
        %v260 = vsub.s32 %v259, 127
        %v261 = vand.u32 2147483647, %v254
        %v262 = vand.u32 %v261, 8388607
        %v263 = vor.u32 %v262, 8388608
        %v264 = vsub.s32 0, %v263
        %v265 = vadd.s32 %v260, 1
        %vm266 = vcmp.gt.s32.totalorder %v265, 0
        %v267 = vsel %vm266, %v265, 0
        %v268 = vshrl.u32 %v267, 5
        %v269 = vand.u32 %v267, 31
        %v270 = vsub.s32 32, %v269
        %v271 = vshrl.u32 683565275, %v270
        %v272 = vshll.u32 683565275, %v269
        %v273 = vshrl.u32 2475754826, %v270
        %v274 = vor.u32 %v272, %v273
        %v275 = vshll.u32 2475754826, %v269
        %v276 = vshrl.u32 2131351028, %v270
        %v277 = vor.u32 %v275, %v276
        %v278 = vshll.u32 2131351028, %v269
        %v279 = vshrl.u32 2102212464, %v270
        %v280 = vor.u32 %v278, %v279
        %v281 = vshll.u32 2102212464, %v269
        %v282 = vshrl.u32 920167782, %v270
        %v283 = vor.u32 %v281, %v282
        %v284 = vshll.u32 920167782, %v269
        %v285 = vshrl.u32 1326507024, %v270
        %v286 = vor.u32 %v284, %v285
        %vm287 = vcmp.lt.s32.totalorder %v268, 1
        %vm288 = vcmp.lt.s32.totalorder %v268, 2
        %vm289 = vcmp.lt.s32.totalorder %v268, 3
        %vm290 = vcmp.lt.s32.totalorder %v268, 4
        %v291 = vsel %vm287, %v271, %v274
        %v292 = vsel %vm290, %v280, 2102212464
        %v293 = vsel %vm289, %v277, %v292
        %v294 = vsel %vm288, %v291, %v293
        %v295 = vsel %vm287, %v274, %v277
        %v296 = vsel %vm290, %v283, 920167782
        %v297 = vsel %vm289, %v280, %v296
        %v298 = vsel %vm288, %v295, %v297
        %v299 = vsel %vm287, %v277, %v280
        %v300 = vsel %vm290, %v286, 1326507024
        %v301 = vsel %vm289, %v283, %v300
        %v302 = vsel %vm288, %v299, %v301
        %v303 = vshll.u32 %v263, 8
        %v304 = vmul.u32.u64.compose %v303, %v302
        %v305 = vextract.low.u32 %v304
        %v306 = vextract.high.u32 %v304
        %v307 = vmul.u32.u64.compose %v303, %v298
        %v308 = vextract.low.u32 %v307
        %v309 = vextract.high.u32 %v307
        %v310 = vmul.u32 %v303, %v294
        %v311 = vadd.s32 %v306, %v308
        %vm312 = vc.u32 %v306, %v308
        %v313 = vadd.s32 %v309, 1
        %v314 = vsel %vm312, %v313, %v309
        %v315 = vadd.s32 %v310, %v314
        %v316 = vadd.s32 %v315, 536870912
        %v317 = vshrl.u32 %v316, 30
        %v318 = vshll.u32 %v317, 30
        %v319 = vsub.s32 %v315, %v318
        %vm320 = vcmp.lt.s32.totalorder %v319, 0
        %v321 = vsub.s32 0, %v319
        %v322 = vsel %vm320, %v321, %v319
        %v323 = vclz %v322
        %v324 = vsub.s32 %v323, 2
        %vm325 = vcmp.gt.s32.totalorder 0, %v324
        %v326 = vsel %vm325, 0, %v324
        %v327 = vsub.s32 32, %v326
        %v328 = vshll.u32 %v319, %v326
        %v329 = vshrl.u32 %v311, %v327
        %v330 = vor.u32 %v328, %v329
        %v331 = vsub.s32 4294967266, %v326
        %v332 = vadd.s32 %v331, 127
        %v333 = vshll.u32 %v332, 23
        %v334 = vor.u32 4788187, %v333
        %v335 = vand.u32 2147483647, %v334
        %v337 = vcvt.s32.f32 %v330
        %v338 = vmul.f32 %v337, %v335
        %v339 = vxor.u32 %v338, 2147483648
        %v340 = vsel %vm257, %v339, %v338
        %v341 = vsub.s32 4, %v317
        %v342 = vsel %vm257, %v341, %v317
        %v343 = vsel %vm256, %v254, %v340
        %v344 = vsel %vm256, 0, %v342
        %v345 = vcosq.f32.pop %v343
        %v346 = vsinq.f32.pop %v343
        %vm347 = vweird.f32 %v254
        %v348 = vadd.s32 %v344, 3
        %v349 = vand.u32 %v348, 3
        %vm350 = vcmp.lt.s32.totalorder %v349, 2
        %vm351 = vcmp.eq.s32.totalorder %v349, 0
        %v352 = vxor.u32 %v346, 2147483648
        %v353 = vsel %vm351, %v345, %v352
        %vm354 = vcmp.eq.s32.totalorder %v349, 2
        %v355 = vxor.u32 %v345, 2147483648
        %v356 = vsel %vm354, %v355, %v346
        %v357 = vsel %vm350, %v353, %v356
        %v358 = vsel %vm347, nan, %v357
        %vm359 = vcmask 261120
        %360 = vst.msk [vmem:[%s210] sm:$0xff] %vm359, %v358
        %s361 = sand.u32 %s131, 1
        %s362 = scalar_lea.sflag [#allocation3], %s361
        %s363 = sand.u32 %s131, 1
        %s364 = smul.addr %s363, 8
        %s365 = scalar_lea.vmem [#allocation2], %s364
        // Predicated region
        $region37: #{tpu_custom_call.1} parent=35 // pred_check
          %p366 = pneg %p141
        $region38: #{tpu_custom_call.1} parent=35 // pred_check_branch
          %368 = sbr.rel (%p366) target = $region40
        $region39: #{tpu_custom_call.1} parent=35 // pred_region
          %s370 = ssub.s32 128, 128
          %371 = vsyncadd %s362, %s370
          %s372 = sadd.s32 %s23, %s22
          %s373 = smul.addr %s372, 128
          %s374 = scalar_lea.hbm %s4, %s373
          %s376 = sshll.u32 %s365, 4
          %s377 = int_to_ptr.vmem [resolvable:$true] %s376
          %379 = dma.vmem_to_hbm [thread:$0]  %s377, 128, %s374, %s362
        $region40: #{tpu_custom_call.1} parent=35 // pred_fallthru
          _
      $region36: #{tpu_custom_call.1} parent=5 // pred_fallthru
        _
      %p380 = scmp.le.s32.totalorder 2, %s13
      // Predicated region
      $region41: #{tpu_custom_call.1} parent=5 // pred_check
        %p381 = pneg %p380
      $region42: #{tpu_custom_call.1} parent=5 // pred_check_branch
        %383 = sbr.rel (%p381) target = $region44
      $region43: #{tpu_custom_call.1} parent=5 // pred_region
        %s384 = ssub.s32 %s13, 2
        // Predicated region
        $region45: #{tpu_custom_call.1} parent=43 // pred_check
          %p385 = pneg %p147
        $region46: #{tpu_custom_call.1} parent=43 // pred_check_branch
          %387 = sbr.rel (%p385) target = $region48
        $region47: #{tpu_custom_call.1} parent=43 // pred_region
          %s388 = sand.u32 %s132, 1
          %s389 = scalar_lea.sflag [#allocation3], %s388
          %s390 = sand.u32 %s132, 1
          %s391 = smul.addr %s390, 8
          %s392 = scalar_lea.vmem [#allocation2], %s391
          %393 = dma.done %s389, 128
        $region48: #{tpu_custom_call.1} parent=43 // pred_fallthru
          _
      $region44: #{tpu_custom_call.1} parent=5 // pred_fallthru
        _
    $region6: #{tpu_custom_call.1} parent=1 // loop_footer
      %s17 = sadd.s32 1, %s13
    $region7: #{tpu_custom_call.1} parent=1 // loop_footer_branch
      %12 = sbr.rel target = $region3
    $region8: #{tpu_custom_call.1} parent=1 // loop_exit
      _
    %394 = vsyncpa [#allocation3], 1
    %s395 = scalar_lea.sflag [#allocation3], 1
    %396 = vsyncpa %s395, 1

</llo_original>
